<compile_context>
chip_gen: v7x
topology: tpu7x:2x2x1
jax: 0.10.0
libtpu: 0.0.40
codegen_flags: <defaults>
</compile_context>

<pallas_src>
import functools

import jax
import jax.numpy as jnp
from jax.experimental import pallas as pl
from jax.experimental.pallas import tpu as pltpu


_EPS = 1e-12          # F.normalize eps
_NEG_SLOPE = 0.01     # F.leaky_relu default negative_slope


# ----------------------------- kernels --------------------------------------


def _att_kernel(q_ref, m_ref, wq_ref, wm_ref, b_ref, out_ref, score_ref):
    """One row-tile of the ATT merge.

    q_ref:     (TN, D)        query level embeddings
    m_ref:     (Lm, TN, D)    message level embeddings (levels 1..L-1)
    wq_ref:    (D, 1)         lin_att weight acting on the query
    wm_ref:    (D, 1)         lin_att weight acting on the message
    b_ref:     (1, 1)  SMEM   lin_att bias
    out_ref:   (TN, D)        merged embedding
    score_ref: (Lm, TN)       per-node softmax attention, level-major
    """
    lm = m_ref.shape[0]                      # num_levels - 1 (static, small)
    tn = q_ref.shape[0]
    b = b_ref[0, 0]

    q = q_ref[...].astype(jnp.float32)
    # x / max(||x||, eps)  ==  x * rsqrt(max(||x||^2, eps^2))  -> EUP rsqrt
    inv_q = jax.lax.rsqrt(
        jnp.maximum(jnp.sum(q * q, axis=-1, keepdims=True), _EPS * _EPS))
    qn = q * inv_q

    wq = wq_ref[...].astype(jnp.float32)     # (D, 1)
    wm = wm_ref[...].astype(jnp.float32)     # (D, 1)
    # Query contribution to every level's score (width-1 matmul on idle MXU);
    # the bias is folded in once here instead of per level.
    s_q = jnp.dot(qn, wq, preferred_element_type=jnp.float32) + b   # (TN, 1)

    # Pass 1: per-level scalars are packed into lane-dense (TN, Lm) arrays as
    # they are produced (lane-mask insert), so only two packed stripes stay
    # live across the softmax instead of ~4*Lm lane-sparse (TN, 1) columns.
    lane = jax.lax.broadcasted_iota(jnp.int32, (tn, lm), 1)
    s = jnp.zeros((tn, lm), jnp.float32)        # packed raw scores
    inv_m = jnp.zeros((tn, lm), jnp.float32)    # packed inverse norms
    for l in range(lm):                      # static unroll (Lm is tiny)
        m_l = m_ref[l].astype(jnp.float32)   # (TN, D)
        inv_l = jax.lax.rsqrt(
            jnp.maximum(jnp.sum(m_l * m_l, axis=-1, keepdims=True),
                        _EPS * _EPS))                               # (TN, 1)
        dot_l = jnp.dot(m_l, wm, preferred_element_type=jnp.float32)
        s_l = dot_l * inv_l + s_q
        s_l = jnp.where(s_l >= 0.0, s_l, _NEG_SLOPE * s_l)          # leaky_relu
        s = jnp.where(lane == l, s_l, s)         # insert column l
        inv_m = jnp.where(lane == l, inv_l, inv_m)

    # Segment softmax across the (L-1) messages of each node, done once on the
    # packed (TN, Lm) array.
    s_max = jnp.max(s, axis=1, keepdims=True)
    e = jnp.exp(s - s_max)
    denom = jnp.sum(e, axis=1, keepdims=True)
    # Accurate reciprocal (scores are checked to 1e-5); approx=True (~1e-3)
    # would break the tolerance.
    att = e * pl.reciprocal(denom)                                  # (TN, Lm)
    # NOTE: F.dropout on the scores is the identity in eval mode.

    # Pass 2: re-read messages from VMEM (cheap) and accumulate the output.
    w = att * inv_m                                                 # (TN, Lm)
    out = qn
    for l in range(lm):
        out = out + w[:, l:l + 1] * m_ref[l].astype(jnp.float32)
    out_ref[...] = out.astype(out_ref.dtype)
    # Lane-dense, level-major score store (single XLU transpose; no
    # concatenate and no wrapper-side transpose pass over HBM afterwards).
    score_ref[...] = jnp.transpose(att).astype(score_ref.dtype)


def _mean_kernel(x_ref, out_ref):
    # x_ref: (L, TN, D)  out_ref: (TN, D)   -- small-L single-block form
    L = x_ref.shape[0]
    acc = x_ref[0].astype(jnp.float32)
    for l in range(1, L):
        acc = acc + x_ref[l].astype(jnp.float32)
    out_ref[...] = (acc * (1.0 / L)).astype(out_ref.dtype)


def _mean_acc_kernel(scale, x_ref, out_ref, acc_ref):
    # x_ref: (1, TN, D)  out_ref: (TN, D)  acc_ref: (TN, D) f32 scratch
    # Accumulator form: tile stays maximal regardless of L and every DMA is a
    # contiguous (TN, D) block.
    @pl.when(pl.program_id(1) == 0)
    def _():
        acc_ref[...] = jnp.zeros_like(acc_ref)

    acc_ref[...] += x_ref[0].astype(jnp.float32)

    @pl.when(pl.program_id(1) == pl.num_programs(1) - 1)
    def _():
        out_ref[...] = (acc_ref[...] * scale).astype(out_ref.dtype)


# ----------------------------- tiling helpers --------------------------------


def _tpu_params():
    """Generation-aware tiling defaults (conservative for unknown devices)."""
    kind = ""
    try:
        kind = getattr(jax.devices()[0], "device_kind", "").lower()
    except Exception:
        pass
    if "v7" in kind:
        # 3.2 TB/s HBM: amortize the ~0.35us/step overhead with big tiles, but
        # keep >= 4 grid steps so each megacore TC still double-buffers.
        return dict(max_tile=2048, budget=22 << 20, min_steps=4,
                    scoped_default=32 << 20, vmem_cap=56 << 20)
    if "v6" in kind:
        return dict(max_tile=2048, budget=24 << 20, min_steps=2,
                    scoped_default=32 << 20, vmem_cap=100 << 20)
    if "v5e" in kind or "v5 lite" in kind or "v5lite" in kind:
        # With the packed-scalar fix, 1024-row tiles are fine on v5e.
        return dict(max_tile=1024, budget=12 << 20, min_steps=2,
                    scoped_default=16 << 20, vmem_cap=100 << 20)
    return dict(max_tile=1024, budget=10 << 20, min_steps=2,
                scoped_default=16 << 20, vmem_cap=64 << 20)


def _pick_tile_n(N, D, blocks_per_step, itemsize, p):
    """Row tile: largest multiple of 128 whose double-buffered blocks fit the
    generation budget, capped so the grid has >= min_steps steps (DMA/compute
    overlap; >= 2 steps per TensorCore on v7x megacore).  Small inputs use one
    full block (block dims == array dims is always a legal BlockSpec)."""
    if N <= 256:
        return N
    t = p["budget"] // (2 * blocks_per_step * D * itemsize)
    steps_cap = max(128, (N // p["min_steps"] // 128) * 128)
    t = min(t, p["max_tile"], steps_cap)
    t = max(128, (t // 128) * 128)
    return int(t)


def _vmem_limit(tile_n, D, blocks_per_step, itemsize, p):
    """Explicit vmem_limit_bytes only when the per-step working set exceeds
    the scoped default (double-buffered blocks + a lane-padded score stripe +
    generous headroom), capped well under physical VMEM."""
    need = 2 * blocks_per_step * tile_n * D * itemsize + 2 * tile_n * 128 * 4
    need = int(need * 3 // 2) + (4 << 20)
    if need <= p["scoped_default"]:
        return None
    return int(min(p["vmem_cap"], need))


def _pad_rows(x, n_pad, axis):
    if n_pad == 0:
        return x
    pads = [(0, 0)] * x.ndim
    pads[axis] = (0, n_pad)
    return jnp.pad(x, pads)


# ----------------------------- wrappers --------------------------------------


def merge_xs_att(xs_stacked, w_att, b_att, *, tile_n=None):
    """ATT mode. xs_stacked: [L, N, D], w_att: [1, 2D], b_att: [1]."""
    L, N, D = xs_stacked.shape
    assert L > 1
    Lm = L - 1
    itemsize = jnp.dtype(xs_stacked.dtype).itemsize
    p = _tpu_params()

    if tile_n is None:
        tile_n = _pick_tile_n(N, D, Lm + 2, itemsize, p)   # q + Lm msgs + out
    n_pad = (-N) % tile_n
    Np = N + n_pad
    assert tile_n == Np or tile_n % 128 == 0

    q = _pad_rows(xs_stacked[0], n_pad, axis=0)
    msgs = _pad_rows(xs_stacked[1:], n_pad, axis=1)

    # lin_att weight is (1, 2D): first D columns act on the message,
    # last D columns on the (repeated) query.  Pass them as (D, 1) so the
    # per-level dot products run on the (otherwise idle) MXU.
    w_m = w_att[0, :D].reshape(D, 1).astype(jnp.float32)
    w_q = w_att[0, D:].reshape(D, 1).astype(jnp.float32)
    b = b_att.reshape(1, 1).astype(jnp.float32)

    vmem_limit = _vmem_limit(tile_n, D, Lm + 2, itemsize, p)

    emb, score_ln = pl.pallas_call(
        _att_kernel,
        out_shape=(
            jax.ShapeDtypeStruct((Np, D), xs_stacked.dtype),
            jax.ShapeDtypeStruct((Lm, Np), jnp.float32),
        ),
        grid_spec=pltpu.PrefetchScalarGridSpec(
            num_scalar_prefetch=0,
            grid=(Np // tile_n,),
            in_specs=[
                pl.BlockSpec((tile_n, D), lambda i: (i, 0)),
                pl.BlockSpec((Lm, tile_n, D), lambda i: (0, i, 0)),
                pl.BlockSpec((D, 1), lambda i: (0, 0)),
                pl.BlockSpec((D, 1), lambda i: (0, 0)),
                pl.BlockSpec(memory_space=pltpu.MemorySpace.SMEM),
            ],
            out_specs=[
                pl.BlockSpec((tile_n, D), lambda i: (i, 0)),
                pl.BlockSpec((Lm, tile_n), lambda i: (0, i)),
            ],
        ),
        compiler_params=pltpu.CompilerParams(
            dimension_semantics=("parallel",),
            vmem_limit_bytes=vmem_limit),
    )(q, msgs, w_q, w_m, b)

    if n_pad:
        emb = emb[:N]
        score_ln = score_ln[:, :N]
    # PyTorch returns a flat score of shape ((L-1)*N,) ordered level-major
    # (messages were concatenated along dim 0), i.e. score[l*N + n]; the
    # kernel already emits (Lm, N) so this reshape is free.
    score = score_ln.reshape(-1)
    return emb, score


def merge_xs_mean(xs_stacked, *, tile_n=None):
    L, N, D = xs_stacked.shape
    itemsize = jnp.dtype(xs_stacked.dtype).itemsize
    p = _tpu_params()
    use_acc = L > 4                       # accumulator form for larger L
    blocks = 3 if use_acc else L + 1      # per-step resident (TN, D) blocks
    if tile_n is None:
        tile_n = _pick_tile_n(N, D, blocks, itemsize, p)
    n_pad = (-N) % tile_n
    Np = N + n_pad
    assert tile_n == Np or tile_n % 128 == 0

    x = _pad_rows(xs_stacked, n_pad, axis=1)
    vmem_limit = _vmem_limit(tile_n, D, blocks, itemsize, p)

    if use_acc:
        emb = pl.pallas_call(
            functools.partial(_mean_acc_kernel, 1.0 / L),
            out_shape=jax.ShapeDtypeStruct((Np, D), xs_stacked.dtype),
            grid_spec=pltpu.PrefetchScalarGridSpec(
                num_scalar_prefetch=0,
                grid=(Np // tile_n, L),
                in_specs=[pl.BlockSpec((1, tile_n, D), lambda i, l: (l, i, 0))],
                out_specs=pl.BlockSpec((tile_n, D), lambda i, l: (i, 0)),
                scratch_shapes=[pltpu.VMEM((tile_n, D), jnp.float32)],
            ),
            compiler_params=pltpu.CompilerParams(
                dimension_semantics=("parallel", "arbitrary"),
                vmem_limit_bytes=vmem_limit),
        )(x)
    else:
        emb = pl.pallas_call(
            _mean_kernel,
            out_shape=jax.ShapeDtypeStruct((Np, D), xs_stacked.dtype),
            grid_spec=pltpu.PrefetchScalarGridSpec(
                num_scalar_prefetch=0,
                grid=(Np // tile_n,),
                in_specs=[pl.BlockSpec((L, tile_n, D), lambda i: (0, i, 0))],
                out_specs=pl.BlockSpec((tile_n, D), lambda i: (i, 0)),
            ),
            compiler_params=pltpu.CompilerParams(
                dimension_semantics=("parallel",),
                vmem_limit_bytes=vmem_limit),
        )(x)
    if n_pad:
        emb = emb[:N]
    return emb, None


def merge_xs(xs_stacked, mode, w_att=None, b_att=None):
    if mode == "NONE":
        return xs_stacked[0], None
    if mode == "MEAN":
        return merge_xs_mean(xs_stacked)
    if mode == "ATT":
        return merge_xs_att(xs_stacked, w_att, b_att)
    # TODO(synk): 'MAX' / 'LSTM' / 'LINEAR' modes rely on JumpingKnowledge /
    # lin_top_down which are not defined in the provided module.
    raise NotImplementedError(mode)


# ----------------------------- reference (pure JAX) --------------------------


def _ref_att(xs, w, b):
    L, N, D = xs.shape
    eps = 1e-12
    q = xs[0]
    msg = xs[1:].reshape((L - 1) * N, D)
    qn = q / jnp.maximum(jnp.linalg.norm(q, axis=-1, keepdims=True), eps)
    mn = msg / jnp.maximum(jnp.linalg.norm(msg, axis=-1, keepdims=True), eps)
    cat = jnp.concatenate([mn, jnp.tile(qn, (L - 1, 1))], axis=-1)
    s = (cat @ w.T + b)[:, 0]
    s = jnp.where(s >= 0, s, 0.01 * s)
    att = jax.nn.softmax(s.reshape(L - 1, N), axis=0)
    emb = qn + jnp.sum(att[:, :, None] * mn.reshape(L - 1, N, D), axis=0)
    return emb, att.reshape(-1)


# ----------------------------- main ------------------------------------------

if __name__ == "__main__":
    key = jax.random.PRNGKey(0)

    # ---- small shape: single full block -------------------------------------
    num_levels, N, dim = 3, 16, 32
    kx, kw, kb, k2, k3 = jax.random.split(key, 5)
    xs = jax.random.normal(kx, (num_levels, N, dim), dtype=jnp.float32)
    # nn.Linear(2*dim, 1): weight [1, 2*dim], bias [1]
    w_att = 0.1 * jax.random.normal(kw, (1, 2 * dim), dtype=jnp.float32)
    b_att = 0.1 * jax.random.normal(kb, (1,), dtype=jnp.float32)

    emb, score = merge_xs(xs, mode="ATT", w_att=w_att, b_att=b_att)
    emb, score = jax.block_until_ready((emb, score))
    emb_ref, score_ref = _ref_att(xs, w_att, b_att)
    assert jnp.allclose(emb, emb_ref, atol=1e-5, rtol=1e-5)
    assert jnp.allclose(score, score_ref, atol=1e-5, rtol=1e-5)

    emb_mean, _ = merge_xs(xs, mode="MEAN")
    jax.block_until_ready(emb_mean)
    assert jnp.allclose(emb_mean, jnp.mean(xs, axis=0), atol=1e-6)

    emb_none, _ = merge_xs(xs, mode="NONE")
    jax.block_until_ready(emb_none)

    # ---- slightly larger shape: exercises the tiled + row-padded path -------
    num_levels2, N2, dim2 = 3, 300, 128      # tile_n=128 -> pad to 384, grid=3
    kx2, kw2, kb2 = jax.random.split(k2, 3)
    xs2 = jax.random.normal(kx2, (num_levels2, N2, dim2), dtype=jnp.float32)
    w2 = 0.1 * jax.random.normal(kw2, (1, 2 * dim2), dtype=jnp.float32)
    b2 = 0.1 * jax.random.normal(kb2, (1,), dtype=jnp.float32)

    emb2, score2 = merge_xs(xs2, mode="ATT", w_att=w2, b_att=b2)
    emb2, score2 = jax.block_until_ready((emb2, score2))
    emb2_ref, score2_ref = _ref_att(xs2, w2, b2)
    assert jnp.allclose(emb2, emb2_ref, atol=1e-5, rtol=1e-5)
    assert jnp.allclose(score2, score2_ref, atol=1e-5, rtol=1e-5)

    emb2_mean, _ = merge_xs(xs2, mode="MEAN")
    jax.block_until_ready(emb2_mean)
    assert jnp.allclose(emb2_mean, jnp.mean(xs2, axis=0), atol=1e-5)

    # ---- MEAN with more levels: exercises the accumulator (2-D grid) path ----
    xs3 = jax.random.normal(k3, (6, 64, 128), dtype=jnp.float32)
    emb3_mean, _ = merge_xs(xs3, mode="MEAN")
    jax.block_until_ready(emb3_mean)
    assert jnp.allclose(emb3_mean, jnp.mean(xs3, axis=0), atol=1e-5)

    print("KERNEL_OK")
</pallas_src>

<mosaic_0001>
module attributes {stable_mosaic.version = 11 : i64} {
  func.func @_att_kernel(%arg0: i32, %arg1: memref<16x32xf32, #tpu.memory_space<vmem>>, %arg2: memref<2x16x32xf32, #tpu.memory_space<vmem>>, %arg3: memref<32x1xf32, #tpu.memory_space<vmem>>, %arg4: memref<32x1xf32, #tpu.memory_space<vmem>>, %arg5: memref<1x1xf32, #tpu.memory_space<smem>>, %arg6: memref<16x32xf32, #tpu.memory_space<vmem>>, %arg7: memref<2x16xf32, #tpu.memory_space<vmem>>) attributes {dimension_semantics = [#tpu.dimension_semantics<parallel>], iteration_bounds = array<i64: 1>, scalar_prefetch = 0 : i64, scratch_operands = 0 : i64, tpu.core_type = #tpu.core_type<tc>, window_params = [{transform_indices = @transform_0, window_bounds = array<i64: 16, 32>}, {transform_indices = @transform_1, window_bounds = array<i64: 2, 16, 32>}, {pipeline_mode = #tpu.pipeline_mode<synchronous>, transform_indices = @transform_2, window_bounds = array<i64: 32, 1>}, {pipeline_mode = #tpu.pipeline_mode<synchronous>, transform_indices = @transform_3, window_bounds = array<i64: 32, 1>}, {transform_indices = @transform_4, window_bounds = array<i64: 1, 1>}, {transform_indices = @transform_5, window_bounds = array<i64: 16, 32>}, {transform_indices = @transform_6, window_bounds = array<i64: 2, 16>}]} {
    %c0 = arith.constant 0 : index
    %c0_0 = arith.constant 0 : index
    %0 = memref.load %arg5[%c0, %c0_0] : memref<1x1xf32, #tpu.memory_space<smem>>
    %c0_1 = arith.constant 0 : index
    %c0_2 = arith.constant 0 : index
    %1 = vector.load %arg1[%c0_1, %c0_2] : memref<16x32xf32, #tpu.memory_space<vmem>>, vector<16x32xf32>
    %2 = arith.mulf %1, %1 : vector<16x32xf32>
    %cst = arith.constant dense<0.000000e+00> : vector<16xf32>
    %3 = vector.multi_reduction <add>, %2, %cst [1] : vector<16x32xf32> to vector<16xf32>
    %4 = vector.shape_cast %3 : vector<16xf32> to vector<16x1xf32>
    %cst_3 = arith.constant 1.000000e-24 : f32
    %5 = vector.broadcast %cst_3 : f32 to vector<16x1xf32>
    %6 = arith.maximumf %4, %5 : vector<16x1xf32>
    %7 = math.rsqrt %6 : vector<16x1xf32>
    %8 = vector.broadcast %7 : vector<16x1xf32> to vector<16x32xf32>
    %9 = arith.mulf %1, %8 : vector<16x32xf32>
    %c0_4 = arith.constant 0 : index
    %c0_5 = arith.constant 0 : index
    %10 = vector.load %arg3[%c0_4, %c0_5] : memref<32x1xf32, #tpu.memory_space<vmem>>, vector<32x1xf32>
    %c0_6 = arith.constant 0 : index
    %c0_7 = arith.constant 0 : index
    %11 = vector.load %arg4[%c0_6, %c0_7] : memref<32x1xf32, #tpu.memory_space<vmem>>, vector<32x1xf32>
    %cst_8 = arith.constant dense<0.000000e+00> : vector<16x1xf32>
    %12 = tpu.matmul %9, %10, %cst_8 {dimension_numbers = #tpu.dot_dimension_numbers<[1], [0], [0], [1], [0, 0, 1, 1], [], []>} : vector<16x32xf32>, vector<32x1xf32>, vector<16x1xf32> -> vector<16x1xf32>
    %13 = vector.broadcast %0 : f32 to vector<16x1xf32>
    %14 = arith.addf %12, %13 : vector<16x1xf32>
    %15 = tpu.iota {dimensions = array<i32: 1>} : vector<16x2xi32>
    %cst_9 = arith.constant 0.000000e+00 : f32
    %16 = vector.broadcast %cst_9 : f32 to vector<16x2xf32>
    %cst_10 = arith.constant 0.000000e+00 : f32
    %17 = vector.broadcast %cst_10 : f32 to vector<16x2xf32>
    %c0_11 = arith.constant 0 : index
    %c0_12 = arith.constant 0 : index
    %c0_13 = arith.constant 0 : index
    %18 = vector.load %arg2[%c0_11, %c0_12, %c0_13] : memref<2x16x32xf32, #tpu.memory_space<vmem>>, vector<1x16x32xf32>
    %19 = vector.shape_cast %18 : vector<1x16x32xf32> to vector<16x32xf32>
    %20 = arith.mulf %19, %19 : vector<16x32xf32>
    %cst_14 = arith.constant dense<0.000000e+00> : vector<16xf32>
    %21 = vector.multi_reduction <add>, %20, %cst_14 [1] : vector<16x32xf32> to vector<16xf32>
    %22 = vector.shape_cast %21 : vector<16xf32> to vector<16x1xf32>
    %cst_15 = arith.constant 1.000000e-24 : f32
    %23 = vector.broadcast %cst_15 : f32 to vector<16x1xf32>
    %24 = arith.maximumf %22, %23 : vector<16x1xf32>
    %25 = math.rsqrt %24 : vector<16x1xf32>
    %cst_16 = arith.constant dense<0.000000e+00> : vector<16x1xf32>
    %26 = tpu.matmul %19, %11, %cst_16 {dimension_numbers = #tpu.dot_dimension_numbers<[1], [0], [0], [1], [0, 0, 1, 1], [], []>} : vector<16x32xf32>, vector<32x1xf32>, vector<16x1xf32> -> vector<16x1xf32>
    %27 = arith.mulf %26, %25 : vector<16x1xf32>
    %28 = arith.addf %27, %14 : vector<16x1xf32>
    %cst_17 = arith.constant 0.000000e+00 : f32
    %29 = vector.broadcast %cst_17 : f32 to vector<16x1xf32>
    %30 = arith.cmpf oge, %28, %29 : vector<16x1xf32>
    %cst_18 = arith.constant 0.00999999977 : f32
    %31 = vector.broadcast %cst_18 : f32 to vector<16x1xf32>
    %32 = arith.mulf %31, %28 : vector<16x1xf32>
    %33 = arith.select %30, %28, %32 : vector<16x1xi1>, vector<16x1xf32>
    %c0_i32 = arith.constant 0 : i32
    %34 = vector.broadcast %c0_i32 : i32 to vector<16x2xi32>
    %35 = arith.cmpi eq, %15, %34 : vector<16x2xi32>
    %36 = vector.shape_cast %33 : vector<16x1xf32> to vector<16x1xf32>
    %37 = vector.broadcast %36 : vector<16x1xf32> to vector<16x2xf32>
    %38 = arith.select %35, %37, %16 : vector<16x2xi1>, vector<16x2xf32>
    %c0_i32_19 = arith.constant 0 : i32
    %39 = vector.broadcast %c0_i32_19 : i32 to vector<16x2xi32>
    %40 = arith.cmpi eq, %15, %39 : vector<16x2xi32>
    %41 = vector.shape_cast %25 : vector<16x1xf32> to vector<16x1xf32>
    %42 = vector.broadcast %41 : vector<16x1xf32> to vector<16x2xf32>
    %43 = arith.select %40, %42, %17 : vector<16x2xi1>, vector<16x2xf32>
    %c1 = arith.constant 1 : index
    %c0_20 = arith.constant 0 : index
    %c0_21 = arith.constant 0 : index
    %44 = vector.load %arg2[%c1, %c0_20, %c0_21] : memref<2x16x32xf32, #tpu.memory_space<vmem>>, vector<1x16x32xf32>
    %45 = vector.shape_cast %44 : vector<1x16x32xf32> to vector<16x32xf32>
    %46 = arith.mulf %45, %45 : vector<16x32xf32>
    %cst_22 = arith.constant dense<0.000000e+00> : vector<16xf32>
    %47 = vector.multi_reduction <add>, %46, %cst_22 [1] : vector<16x32xf32> to vector<16xf32>
    %48 = vector.shape_cast %47 : vector<16xf32> to vector<16x1xf32>
    %cst_23 = arith.constant 1.000000e-24 : f32
    %49 = vector.broadcast %cst_23 : f32 to vector<16x1xf32>
    %50 = arith.maximumf %48, %49 : vector<16x1xf32>
    %51 = math.rsqrt %50 : vector<16x1xf32>
    %cst_24 = arith.constant dense<0.000000e+00> : vector<16x1xf32>
    %52 = tpu.matmul %45, %11, %cst_24 {dimension_numbers = #tpu.dot_dimension_numbers<[1], [0], [0], [1], [0, 0, 1, 1], [], []>} : vector<16x32xf32>, vector<32x1xf32>, vector<16x1xf32> -> vector<16x1xf32>
    %53 = arith.mulf %52, %51 : vector<16x1xf32>
    %54 = arith.addf %53, %14 : vector<16x1xf32>
    %cst_25 = arith.constant 0.000000e+00 : f32
    %55 = vector.broadcast %cst_25 : f32 to vector<16x1xf32>
    %56 = arith.cmpf oge, %54, %55 : vector<16x1xf32>
    %cst_26 = arith.constant 0.00999999977 : f32
    %57 = vector.broadcast %cst_26 : f32 to vector<16x1xf32>
    %58 = arith.mulf %57, %54 : vector<16x1xf32>
    %59 = arith.select %56, %54, %58 : vector<16x1xi1>, vector<16x1xf32>
    %c1_i32 = arith.constant 1 : i32
    %60 = vector.broadcast %c1_i32 : i32 to vector<16x2xi32>
    %61 = arith.cmpi eq, %15, %60 : vector<16x2xi32>
    %62 = vector.shape_cast %59 : vector<16x1xf32> to vector<16x1xf32>
    %63 = vector.broadcast %62 : vector<16x1xf32> to vector<16x2xf32>
    %64 = arith.select %61, %63, %38 : vector<16x2xi1>, vector<16x2xf32>
    %c1_i32_27 = arith.constant 1 : i32
    %65 = vector.broadcast %c1_i32_27 : i32 to vector<16x2xi32>
    %66 = arith.cmpi eq, %15, %65 : vector<16x2xi32>
    %67 = vector.shape_cast %51 : vector<16x1xf32> to vector<16x1xf32>
    %68 = vector.broadcast %67 : vector<16x1xf32> to vector<16x2xf32>
    %69 = arith.select %66, %68, %43 : vector<16x2xi1>, vector<16x2xf32>
    %cst_28 = arith.constant dense<0xFF800000> : vector<16xf32>
    %70 = vector.multi_reduction <maximumf>, %64, %cst_28 [1] : vector<16x2xf32> to vector<16xf32>
    %71 = vector.shape_cast %70 : vector<16xf32> to vector<16x1xf32>
    %72 = vector.broadcast %71 : vector<16x1xf32> to vector<16x2xf32>
    %73 = arith.subf %64, %72 : vector<16x2xf32>
    %74 = math.exp %73 : vector<16x2xf32>
    %cst_29 = arith.constant dense<0.000000e+00> : vector<16xf32>
    %75 = vector.multi_reduction <add>, %74, %cst_29 [1] : vector<16x2xf32> to vector<16xf32>
    %76 = vector.shape_cast %75 : vector<16xf32> to vector<16x1xf32>
    %77 = tpu.reciprocal %76 : vector<16x1xf32> -> vector<16x1xf32>
    %78 = vector.broadcast %77 : vector<16x1xf32> to vector<16x2xf32>
    %79 = arith.mulf %74, %78 : vector<16x2xf32>
    %80 = arith.mulf %79, %69 : vector<16x2xf32>
    %81 = vector.extract_strided_slice %80 {offsets = [0, 0], sizes = [16, 1], strides = [1, 1]} : vector<16x2xf32> to vector<16x1xf32>
    %c0_30 = arith.constant 0 : index
    %c0_31 = arith.constant 0 : index
    %c0_32 = arith.constant 0 : index
    %82 = vector.load %arg2[%c0_30, %c0_31, %c0_32] : memref<2x16x32xf32, #tpu.memory_space<vmem>>, vector<1x16x32xf32>
    %83 = vector.shape_cast %82 : vector<1x16x32xf32> to vector<16x32xf32>
    %84 = vector.broadcast %81 : vector<16x1xf32> to vector<16x32xf32>
    %85 = arith.mulf %84, %83 : vector<16x32xf32>
    %86 = arith.addf %9, %85 : vector<16x32xf32>
    %87 = vector.extract_strided_slice %80 {offsets = [0, 1], sizes = [16, 1], strides = [1, 1]} : vector<16x2xf32> to vector<16x1xf32>
    %c1_33 = arith.constant 1 : index
    %c0_34 = arith.constant 0 : index
    %c0_35 = arith.constant 0 : index
    %88 = vector.load %arg2[%c1_33, %c0_34, %c0_35] : memref<2x16x32xf32, #tpu.memory_space<vmem>>, vector<1x16x32xf32>
    %89 = vector.shape_cast %88 : vector<1x16x32xf32> to vector<16x32xf32>
    %90 = vector.broadcast %87 : vector<16x1xf32> to vector<16x32xf32>
    %91 = arith.mulf %90, %89 : vector<16x32xf32>
    %92 = arith.addf %86, %91 : vector<16x32xf32>
    %c0_36 = arith.constant 0 : index
    %c0_37 = arith.constant 0 : index
    %93 = vector.load %arg6[%c0_36, %c0_37] : memref<16x32xf32, #tpu.memory_space<vmem>>, vector<16x32xf32>
    tpu.vector_store %arg6[%c0_36, %c0_37], %92 {strides = array<i32>} : memref<16x32xf32, #tpu.memory_space<vmem>>, vector<16x32xf32>,
    %94 = tpu.transpose %79, [1, 0] : vector<16x2xf32> -> vector<2x16xf32>
    %c0_38 = arith.constant 0 : index
    %c0_39 = arith.constant 0 : index
    %95 = vector.load %arg7[%c0_38, %c0_39] : memref<2x16xf32, #tpu.memory_space<vmem>>, vector<2x16xf32>
    tpu.vector_store %arg7[%c0_38, %c0_39], %94 {strides = array<i32>} : memref<2x16xf32, #tpu.memory_space<vmem>>, vector<2x16xf32>,
    return
  }
  func.func @transform_0(%arg0: i32) -> (i32, i32) {
    %c0_i32 = arith.constant 0 : i32
    %c0_i32_0 = arith.constant 0 : i32
    return %arg0, %c0_i32 : i32, i32
  }
  func.func @transform_1(%arg0: i32) -> (i32, i32, i32) {
    %c0_i32 = arith.constant 0 : i32
    %c0_i32_0 = arith.constant 0 : i32
    %c0_i32_1 = arith.constant 0 : i32
    return %c0_i32, %arg0, %c0_i32_0 : i32, i32, i32
  }
  func.func @transform_2(%arg0: i32) -> (i32, i32) {
    %c0_i32 = arith.constant 0 : i32
    %c0_i32_0 = arith.constant 0 : i32
    %c0_i32_1 = arith.constant 0 : i32
    return %c0_i32, %c0_i32_0 : i32, i32
  }
  func.func @transform_3(%arg0: i32) -> (i32, i32) {
    %c0_i32 = arith.constant 0 : i32
    %c0_i32_0 = arith.constant 0 : i32
    %c0_i32_1 = arith.constant 0 : i32
    return %c0_i32, %c0_i32_0 : i32, i32
  }
  func.func @transform_4(%arg0: i32) -> (i32, i32) {
    %c0_i32 = arith.constant 0 : i32
    %c0_i32_0 = arith.constant 0 : i32
    %c0_i32_1 = arith.constant 0 : i32
    return %c0_i32, %c0_i32_0 : i32, i32
  }
  func.func @transform_5(%arg0: i32) -> (i32, i32) {
    %c0_i32 = arith.constant 0 : i32
    %c0_i32_0 = arith.constant 0 : i32
    return %arg0, %c0_i32 : i32, i32
  }
  func.func @transform_6(%arg0: i32) -> (i32, i32) {
    %c0_i32 = arith.constant 0 : i32
    %c0_i32_0 = arith.constant 0 : i32
    return %c0_i32, %arg0 : i32, i32
  }
}

</mosaic_0001>

<llo_original>
// kernel: tpu_custom_call.1
$region0: #{tpu_custom_call.1}
  #allocation0 [shape = 'u32[]', space=smem, size = 0x4, offset = 0x4, fixed_abs, tag = 'smem constant byte address 0x4 - core index']
  #allocation1 [shape = 'u32[144,128]{1,0:T(1,128)}', space=vmem, size = 0x12000, scoped, tag = 'internal scratch']
  #allocation2 [shape = 'f32[1,1]{1,0:T(1,128)S(6)}', space=smem, size = 0x200, scoped, tag = 'scoped memory for tpu_custom_call.1']
  %s0 = inlined_call_operand.vmem [shape: f32[16,32], index: 0, kind: input, shape index: {}]
  %s1 = inlined_call_operand.vmem [shape: f32[2,16,32], index: 1, kind: input, shape index: {}]
  %s2 = inlined_call_operand.vmem [shape: f32[32,1], index: 2, kind: input, shape index: {}]
  %s3 = inlined_call_operand.vmem [shape: f32[32,1], index: 3, kind: input, shape index: {}]
  %s4 = inlined_call_operand.<no memory space> [shape: f32[1,1], index: 4, kind: input, shape index: {}]
  %s5 = inlined_call_operand.hbm [shape: f32[16,32], index: 5, kind: output, shape index: {0}]
  %s6 = inlined_call_operand.hbm [shape: f32[2,16], index: 6, kind: output, shape index: {1}]
  %7 = xla_tuple %s5, %s6
  %s8 = sld [smem:[#allocation0]]
  $region38: #{tpu_custom_call.1} parent=0
    _
  %s10 = ssub.s32 1, %s8
  %s11 = scalar_select 0, %s10, %s8
  %12 = sst [smem:[#allocation2]] %s4
  $region1: #{tpu_custom_call.1} parent=0
    #allocation3 [shape = 'u8[8192]{0}', space=vmem, size = 0x2000, scoped, tag = 'output window, operand 0, single buffered']
    #allocation4 [shape = 's32[1]{0}', space=sflag, size = 0x4, scoped, tag = 'scoped memory for tpu_custom_call.1']
    #allocation5 [shape = 'u8[1024]{0}', space=vmem, size = 0x400, scoped, tag = 'output window, operand 1, single buffered']
    #allocation6 [shape = 's32[1]{0}', space=sflag, size = 0x4, scoped, tag = 'scoped memory for tpu_custom_call.1']
    %13 = vsyncpa [#allocation4], 0
    %14 = vsyncpa [#allocation6], 0
    // Predicated region
    $region2: #{tpu_custom_call.1} parent=1 // pred_check
      _
    $region3: #{tpu_custom_call.1} parent=1 // pred_check_branch
      %16 = sbr.rel (0) target = $region5
    $region4: #{tpu_custom_call.1} parent=1 // pred_region
      _
    $region5: #{tpu_custom_call.1} parent=1 // pred_fallthru
      _
    // Predicated region
    $region6: #{tpu_custom_call.1} parent=1 // pred_check
      _
    $region7: #{tpu_custom_call.1} parent=1 // pred_check_branch
      %18 = sbr.rel (0) target = $region9
    $region8: #{tpu_custom_call.1} parent=1 // pred_region
      _
    $region9: #{tpu_custom_call.1} parent=1 // pred_fallthru
      _
    // Predicated region
    $region10: #{tpu_custom_call.1} parent=1 // pred_check
      _
    $region11: #{tpu_custom_call.1} parent=1 // pred_check_branch
      %20 = sbr.rel (0) target = $region13
    $region12: #{tpu_custom_call.1} parent=1 // pred_region
      _
    $region13: #{tpu_custom_call.1} parent=1 // pred_fallthru
      _
    // Predicated region
    $region14: #{tpu_custom_call.1} parent=1 // pred_check
      _
    $region15: #{tpu_custom_call.1} parent=1 // pred_check_branch
      %22 = sbr.rel (0) target = $region17
    $region16: #{tpu_custom_call.1} parent=1 // pred_region
      _
    $region17: #{tpu_custom_call.1} parent=1 // pred_fallthru
      _
    // Predicated region
    $region18: #{tpu_custom_call.1} parent=1 // pred_check
      _
    $region19: #{tpu_custom_call.1} parent=1 // pred_check_branch
      %24 = sbr.rel (0) target = $region21
    $region20: #{tpu_custom_call.1} parent=1 // pred_region
      _
    $region21: #{tpu_custom_call.1} parent=1 // pred_fallthru
      _
    %s25 = sld [smem:[#allocation2]]
    %v26 = vld [vmem:[%s0] sm:$0xff]
    %v27 = vld [vmem:[%s0 + $0x8] sm:$0xff]
    %v28 = vmul.f32 %v26, %v26
    %v29 = vmul.f32 %v27, %v27
    %vm30 = vcmask 261120
    %v31 = vsel %vm30, %v28, 0.0
    %32 = vadd.xlane.f32.xlu0 %v31
    %v33 = vpop.xlane.xlu0 %32
    %v34 = vsel %vm30, %v29, 0.0
    %35 = vadd.xlane.f32.xlu0 %v34
    %v36 = vpop.xlane.xlu0 %35
    %v37 = vmax.f32 %v33, 1e-24
    %v38 = vmax.f32 %v36, 1e-24
    %v39 = vrsqrt.pop %v37
    %v40 = vrsqrt.pop %v38
    %v41 = vmul.f32 %v26, %v39
    %v42 = vmul.f32 %v27, %v40
    %v43 = vld [vmem:[%s2] sm:$0xff]
    %v44 = vld [vmem:[%s2 + $0x8] sm:$0xff]
    %v45 = vld [vmem:[%s2 + $0x10] sm:$0xff]
    %v46 = vld [vmem:[%s2 + $0x18] sm:$0xff]
    %v47 = vld [vmem:[%s3] sm:$0xff]
    %v48 = vld [vmem:[%s3 + $0x8] sm:$0xff]
    %v49 = vld [vmem:[%s3 + $0x10] sm:$0xff]
    %v50 = vld [vmem:[%s3 + $0x18] sm:$0xff]
    %v51 = vstv %s25
    %v53 = vsel %vm30, %v41, 0
    %v56 = vsel %vm30, %v42, 0
    %58 = vmatprep.subr.mxu0 0.0
    %59 = vmatpush1.msra.mxu0 %v43
    %60 = vmatprep.subr.mxu0 0.0
    %61 = vmatpush1.msra.mxu0 %v44
    %62 = vmatprep.subr.mxu0 0.0
    %63 = vmatpush1.msra.mxu0 %v45
    %64 = vmatprep.subr.mxu0 0.0
    %65 = vmatpush1.msra.mxu0 %v46
    %66 = vmatprep.subr.mxu0 0.0
    %67 = vmatpush1.msra.mxu0 0.0
    %68 = vmatprep.subr.mxu0 0.0
    %69 = vmatpush1.msra.mxu0 0.0
    %70 = vmatprep.subr.mxu0 0.0
    %71 = vmatpush1.msra.mxu0 0.0
    %72 = vmatprep.subr.mxu0 0.0
    %73 = vmatpush1.msra.mxu0 0.0
    %74 = vmatprep.subr.mxu0 0.0
    %75 = vmatpush1.msra.mxu0 0.0
    %76 = vmatprep.subr.mxu0 0.0
    %77 = vmatpush1.msra.mxu0 0.0
    %78 = vmatprep.subr.mxu0 0.0
    %79 = vmatpush1.msra.mxu0 0.0
    %80 = vmatprep.subr.mxu0 0.0
    %81 = vmatpush1.msra.mxu0 0.0
    %82 = vmatprep.subr.mxu0 0.0
    %83 = vmatpush1.msra.mxu0 0.0
    %84 = vmatprep.subr.mxu0 0.0
    %85 = vmatpush1.msra.mxu0 0.0
    %86 = vmatprep.subr.mxu0 0.0
    %87 = vmatpush1.msra.mxu0 0.0
    %88 = vmatprep.subr.mxu0 0.0
    %89 = vmatpush1.msra.mxu0 0.0
    %90 = vmatprep.subr.mxu0 0.0
    %91 = vmatpush1.msra.mxu0 0.0
    %92 = vmatprep.subr.mxu0 0.0
    %93 = vmatpush1.msra.mxu0 0.0
    %94 = vmatprep.subr.mxu0 0.0
    %95 = vmatpush1.msra.mxu0 0.0
    %96 = vmatprep.subr.mxu0 0.0
    %97 = vmatpush1.msra.mxu0 0.0
    %98 = vmatprep.subr.mxu0 0.0
    %99 = vmatpush1.msra.mxu0 0.0
    %100 = vmatprep.subr.mxu0 0.0
    %101 = vmatpush1.msra.mxu0 0.0
    %102 = vmatprep.subr.mxu0 0.0
    %103 = vmatpush1.msra.mxu0 0.0
    %104 = vmatprep.subr.mxu0 0.0
    %105 = vmatpush1.msra.mxu0 0.0
    %106 = vmatprep.subr.mxu0 0.0
    %107 = vmatpush1.msra.mxu0 0.0
    %108 = vmatprep.subr.mxu0 0.0
    %109 = vmatpush1.msra.mxu0 0.0
    %110 = vmatprep.subr.mxu0 0.0
    %111 = vmatpush1.msra.mxu0 0.0
    %112 = vmatprep.subr.mxu0 0.0
    %113 = vmatpush1.msra.mxu0 0.0
    %114 = vmatprep.subr.mxu0 0.0
    %115 = vmatpush1.msra.mxu0 0.0
    %116 = vmatprep.subr.mxu0 0.0
    %117 = vmatpush1.msra.mxu0 0.0
    %118 = vmatprep.subr.mxu0 0.0
    %119 = vmatpush1.msra.mxu0 0.0
    %120 = vmatprep.subr.mxu0 0.0
    %121 = vmatpush1.msra.mxu0 0.0
    %122 = vmatprep.mubr.f32.mxu0 0.0
    %123 = vmatmul.mubr.f32.gmra.mrb[0].mxu0 %v53
    %v124 = vpop.f32.mrb[0].mxu0
    %v125 = vadd.f32 %v51, %v124
    %v126 = vpop.f32.mrb[0].mxu0
    %127 = vmatprep.mubr.f32.mxu0 0.0
    %128 = vmatmul.mubr.f32.gmra.mrb[0].mxu0 %v56
    %v129 = vpop.f32.mrb[0].mxu0
    %v130 = vadd.f32 %v51, %v129
    %v131 = vpop.f32.mrb[0].mxu0
    %132 = vdwg.mxu0
    %v133 = vlaneseq
    %v134 = vand.u32 %v133, 127
    %v135 = vld [vmem:[%s1] sm:$0xff]
    %v136 = vld [vmem:[%s1 + $0x8] sm:$0xff]
    %v137 = vmul.f32 %v135, %v135
    %v138 = vmul.f32 %v136, %v136
    %v139 = vsel %vm30, %v137, 0.0
    %140 = vadd.xlane.f32.xlu0 %v139
    %v141 = vpop.xlane.xlu0 %140
    %v142 = vsel %vm30, %v138, 0.0
    %143 = vadd.xlane.f32.xlu0 %v142
    %v144 = vpop.xlane.xlu0 %143
    %v145 = vmax.f32 %v141, 1e-24
    %v146 = vmax.f32 %v144, 1e-24
    %v147 = vrsqrt.pop %v145
    %v148 = vrsqrt.pop %v146
    %v150 = vsel %vm30, %v135, 0
    %v153 = vsel %vm30, %v136, 0
    %155 = vmatprep.subr.mxu0 0.0
    %156 = vmatpush1.msra.mxu0 %v47
    %157 = vmatprep.subr.mxu0 0.0
    %158 = vmatpush1.msra.mxu0 %v48
    %159 = vmatprep.subr.mxu0 0.0
    %160 = vmatpush1.msra.mxu0 %v49
    %161 = vmatprep.subr.mxu0 0.0
    %162 = vmatpush1.msra.mxu0 %v50
    %163 = vmatprep.subr.mxu0 0.0
    %164 = vmatpush1.msra.mxu0 0.0
    %165 = vmatprep.subr.mxu0 0.0
    %166 = vmatpush1.msra.mxu0 0.0
    %167 = vmatprep.subr.mxu0 0.0
    %168 = vmatpush1.msra.mxu0 0.0
    %169 = vmatprep.subr.mxu0 0.0
    %170 = vmatpush1.msra.mxu0 0.0
    %171 = vmatprep.subr.mxu0 0.0
    %172 = vmatpush1.msra.mxu0 0.0
    %173 = vmatprep.subr.mxu0 0.0
    %174 = vmatpush1.msra.mxu0 0.0
    %175 = vmatprep.subr.mxu0 0.0
    %176 = vmatpush1.msra.mxu0 0.0
    %177 = vmatprep.subr.mxu0 0.0
    %178 = vmatpush1.msra.mxu0 0.0
    %179 = vmatprep.subr.mxu0 0.0
    %180 = vmatpush1.msra.mxu0 0.0
    %181 = vmatprep.subr.mxu0 0.0
    %182 = vmatpush1.msra.mxu0 0.0
    %183 = vmatprep.subr.mxu0 0.0
    %184 = vmatpush1.msra.mxu0 0.0
    %185 = vmatprep.subr.mxu0 0.0
    %186 = vmatpush1.msra.mxu0 0.0
    %187 = vmatprep.subr.mxu0 0.0
    %188 = vmatpush1.msra.mxu0 0.0
    %189 = vmatprep.subr.mxu0 0.0
    %190 = vmatpush1.msra.mxu0 0.0
    %191 = vmatprep.subr.mxu0 0.0
    %192 = vmatpush1.msra.mxu0 0.0
    %193 = vmatprep.subr.mxu0 0.0
    %194 = vmatpush1.msra.mxu0 0.0
    %195 = vmatprep.subr.mxu0 0.0
    %196 = vmatpush1.msra.mxu0 0.0
    %197 = vmatprep.subr.mxu0 0.0
    %198 = vmatpush1.msra.mxu0 0.0
    %199 = vmatprep.subr.mxu0 0.0
    %200 = vmatpush1.msra.mxu0 0.0
    %201 = vmatprep.subr.mxu0 0.0
    %202 = vmatpush1.msra.mxu0 0.0
    %203 = vmatprep.subr.mxu0 0.0
    %204 = vmatpush1.msra.mxu0 0.0
    %205 = vmatprep.subr.mxu0 0.0
    %206 = vmatpush1.msra.mxu0 0.0
    %207 = vmatprep.subr.mxu0 0.0
    %208 = vmatpush1.msra.mxu0 0.0
    %209 = vmatprep.subr.mxu0 0.0
    %210 = vmatpush1.msra.mxu0 0.0
    %211 = vmatprep.subr.mxu0 0.0
    %212 = vmatpush1.msra.mxu0 0.0
    %213 = vmatprep.subr.mxu0 0.0
    %214 = vmatpush1.msra.mxu0 0.0
    %215 = vmatprep.subr.mxu0 0.0
    %216 = vmatpush1.msra.mxu0 0.0
    %217 = vmatprep.subr.mxu0 0.0
    %218 = vmatpush1.msra.mxu0 0.0
    %219 = vmatprep.mubr.f32.mxu0 0.0
    %220 = vmatmul.mubr.f32.gmra.mrb[0].mxu0 %v150
    %v221 = vpop.f32.mrb[0].mxu0
    %v222 = vadd.f32 0.0, %v221
    %v223 = vpop.f32.mrb[0].mxu0
    %224 = vmatprep.mubr.f32.mxu0 0.0
    %225 = vmatmul.mubr.f32.gmra.mrb[0].mxu0 %v153
    %v226 = vpop.f32.mrb[0].mxu0
    %v227 = vadd.f32 0.0, %v226
    %v228 = vpop.f32.mrb[0].mxu0
    %229 = vdwg.mxu0
    %v230 = vmul.f32 %v222, %v147
    %v231 = vmul.f32 %v227, %v148
    %v232 = vadd.f32 %v230, %v125
    %v233 = vadd.f32 %v231, %v130
    %vm234 = vcmp.ge.f32.partialorder %v232, 0.0
    %vm235 = vcmp.ge.f32.partialorder %v233, 0.0
    %v236 = vmul.f32 %v232, 0.01
    %v237 = vmul.f32 %v233, 0.01
    %v238 = vsel %vm234, %v232, %v236
    %v239 = vsel %vm235, %v233, %v237
    %vm240 = vcmp.eq.s32.totalorder %v134, 0
    %242 = vset.pattern.permute.xlu0 0
    %243 = vperm.xlu0 %242, %v238
    %v244 = vpop.permute.xlu0 %243
    %247 = vset.pattern.permute.xlu0 0
    %248 = vperm.xlu0 %247, %v239
    %v249 = vpop.permute.xlu0 %248
    %v251 = vsel %vm240, %v244, 0.0
    %v252 = vsel %vm240, %v249, 0.0
    %v253 = vsel %vm240, %v147, 0.0
    %v254 = vsel %vm240, %v148, 0.0
    %s255 = scalar_lea.vmem %s1, 16
    %v256 = vld [vmem:[%s255] sm:$0xff]
    %v257 = vld [vmem:[%s255 + $0x8] sm:$0xff]
    %v258 = vmul.f32 %v256, %v256
    %v259 = vmul.f32 %v257, %v257
    %v260 = vsel %vm30, %v258, 0.0
    %261 = vadd.xlane.f32.xlu0 %v260
    %v262 = vpop.xlane.xlu0 %261
    %v263 = vsel %vm30, %v259, 0.0
    %264 = vadd.xlane.f32.xlu0 %v263
    %v265 = vpop.xlane.xlu0 %264
    %v266 = vmax.f32 %v262, 1e-24
    %v267 = vmax.f32 %v265, 1e-24
    %v268 = vrsqrt.pop %v266
    %v269 = vrsqrt.pop %v267
    %v271 = vsel %vm30, %v256, 0
    %v274 = vsel %vm30, %v257, 0
    %276 = vmatprep.subr.mxu0 0.0
    %277 = vmatpush1.msra.mxu0 %v47
    %278 = vmatprep.subr.mxu0 0.0
    %279 = vmatpush1.msra.mxu0 %v48
    %280 = vmatprep.subr.mxu0 0.0
    %281 = vmatpush1.msra.mxu0 %v49
    %282 = vmatprep.subr.mxu0 0.0
    %283 = vmatpush1.msra.mxu0 %v50
    %284 = vmatprep.subr.mxu0 0.0
    %285 = vmatpush1.msra.mxu0 0.0
    %286 = vmatprep.subr.mxu0 0.0
    %287 = vmatpush1.msra.mxu0 0.0
    %288 = vmatprep.subr.mxu0 0.0
    %289 = vmatpush1.msra.mxu0 0.0
    %290 = vmatprep.subr.mxu0 0.0
    %291 = vmatpush1.msra.mxu0 0.0
    %292 = vmatprep.subr.mxu0 0.0
    %293 = vmatpush1.msra.mxu0 0.0
    %294 = vmatprep.subr.mxu0 0.0
    %295 = vmatpush1.msra.mxu0 0.0
    %296 = vmatprep.subr.mxu0 0.0
    %297 = vmatpush1.msra.mxu0 0.0
    %298 = vmatprep.subr.mxu0 0.0
    %299 = vmatpush1.msra.mxu0 0.0
    %300 = vmatprep.subr.mxu0 0.0
    %301 = vmatpush1.msra.mxu0 0.0
    %302 = vmatprep.subr.mxu0 0.0
    %303 = vmatpush1.msra.mxu0 0.0
    %304 = vmatprep.subr.mxu0 0.0
    %305 = vmatpush1.msra.mxu0 0.0
    %306 = vmatprep.subr.mxu0 0.0
    %307 = vmatpush1.msra.mxu0 0.0
    %308 = vmatprep.subr.mxu0 0.0
    %309 = vmatpush1.msra.mxu0 0.0
    %310 = vmatprep.subr.mxu0 0.0
    %311 = vmatpush1.msra.mxu0 0.0
    %312 = vmatprep.subr.mxu0 0.0
    %313 = vmatpush1.msra.mxu0 0.0
    %314 = vmatprep.subr.mxu0 0.0
    %315 = vmatpush1.msra.mxu0 0.0
    %316 = vmatprep.subr.mxu0 0.0
    %317 = vmatpush1.msra.mxu0 0.0
    %318 = vmatprep.subr.mxu0 0.0
    %319 = vmatpush1.msra.mxu0 0.0
    %320 = vmatprep.subr.mxu0 0.0
    %321 = vmatpush1.msra.mxu0 0.0
    %322 = vmatprep.subr.mxu0 0.0
    %323 = vmatpush1.msra.mxu0 0.0
    %324 = vmatprep.subr.mxu0 0.0
    %325 = vmatpush1.msra.mxu0 0.0
    %326 = vmatprep.subr.mxu0 0.0
    %327 = vmatpush1.msra.mxu0 0.0
    %328 = vmatprep.subr.mxu0 0.0
    %329 = vmatpush1.msra.mxu0 0.0
    %330 = vmatprep.subr.mxu0 0.0
    %331 = vmatpush1.msra.mxu0 0.0
    %332 = vmatprep.subr.mxu0 0.0
    %333 = vmatpush1.msra.mxu0 0.0
    %334 = vmatprep.subr.mxu0 0.0
    %335 = vmatpush1.msra.mxu0 0.0
    %336 = vmatprep.subr.mxu0 0.0
    %337 = vmatpush1.msra.mxu0 0.0
    %338 = vmatprep.subr.mxu0 0.0
    %339 = vmatpush1.msra.mxu0 0.0
    %340 = vmatprep.mubr.f32.mxu0 0.0
    %341 = vmatmul.mubr.f32.gmra.mrb[0].mxu0 %v271
    %v342 = vpop.f32.mrb[0].mxu0
    %v343 = vadd.f32 0.0, %v342
    %v344 = vpop.f32.mrb[0].mxu0
    %345 = vmatprep.mubr.f32.mxu0 0.0
    %346 = vmatmul.mubr.f32.gmra.mrb[0].mxu0 %v274
    %v347 = vpop.f32.mrb[0].mxu0
    %v348 = vadd.f32 0.0, %v347
    %v349 = vpop.f32.mrb[0].mxu0
    %350 = vdwg.mxu0
    %v351 = vmul.f32 %v343, %v268
    %v352 = vmul.f32 %v348, %v269
    %v353 = vadd.f32 %v351, %v125
    %v354 = vadd.f32 %v352, %v130
    %vm355 = vcmp.ge.f32.partialorder %v353, 0.0
    %vm356 = vcmp.ge.f32.partialorder %v354, 0.0
    %v357 = vmul.f32 %v353, 0.01
    %v358 = vmul.f32 %v354, 0.01
    %v359 = vsel %vm355, %v353, %v357
    %v360 = vsel %vm356, %v354, %v358
    %vm361 = vcmp.eq.s32.totalorder %v134, 1
    %363 = vset.pattern.permute.xlu0 0
    %364 = vperm.xlu0 %363, %v359
    %v365 = vpop.permute.xlu0 %364
    %368 = vset.pattern.permute.xlu0 0
    %369 = vperm.xlu0 %368, %v360
    %v370 = vpop.permute.xlu0 %369
    %v372 = vsel %vm361, %v365, %v251
    %v373 = vsel %vm361, %v370, %v252
    %v374 = vsel %vm361, %v268, %v253
    %v375 = vsel %vm361, %v269, %v254
    %vm376 = vcmask 15360
    %v377 = vsel %vm376, %v372, -inf
    %378 = vmax.xlane.f32.xlu0 %v377
    %v379 = vpop.xlane.xlu0 %378
    %v380 = vsel %vm376, %v373, -inf
    %381 = vmax.xlane.f32.xlu0 %v380
    %v382 = vpop.xlane.xlu0 %381
    %v383 = vsub.f32 %v372, %v379
    %v384 = vsub.f32 %v373, %v382
    %v385 = vmul.f32 %v383, 1.442695
    %v386 = vpow.pop %v385
    %v387 = vmul.f32 %v384, 1.442695
    %v388 = vpow.pop %v387
    %v389 = vsel %vm376, %v386, 0.0
    %390 = vadd.xlane.f32.xlu0 %v389
    %v391 = vpop.xlane.xlu0 %390
    %v392 = vsel %vm376, %v388, 0.0
    %393 = vadd.xlane.f32.xlu0 %v392
    %v394 = vpop.xlane.xlu0 %393
    %v395 = vrcp.pop %v391
    %v396 = vrcp.pop %v394
    %v397 = vmul.f32 %v386, %v395
    %v398 = vmul.f32 %v388, %v396
    %v399 = vmul.f32 %v397, %v374
    %v400 = vmul.f32 %v398, %v375
    %402 = vset.pattern.permute.xlu0 0
    %403 = vperm.xlu0 %402, %v399
    %v404 = vpop.permute.xlu0 %403
    %407 = vset.pattern.permute.xlu0 0
    %408 = vperm.xlu0 %407, %v400
    %v409 = vpop.permute.xlu0 %408
    %v411 = vmul.f32 %v404, %v135
    %v412 = vmul.f32 %v409, %v136
    %v413 = vadd.f32 %v41, %v411
    %v414 = vadd.f32 %v42, %v412
    %415 = vset.pattern.permute.xlu0 1
    %416 = vperm.xlu0 %415, %v399
    %v417 = vpop.permute.xlu0 %416
    %419 = vset.pattern.permute.xlu0 1
    %420 = vperm.xlu0 %419, %v400
    %v421 = vpop.permute.xlu0 %420
    %v423 = vmul.f32 %v417, %v256
    %v424 = vmul.f32 %v421, %v257
    %v425 = vadd.f32 %v413, %v423
    %v426 = vadd.f32 %v414, %v424
    %427 = vst.msk [vmem:[#allocation3] sm:$0xff] %vm30, %v425
    %428 = vst.msk [vmem:[#allocation3 + $0x8] sm:$0xff] %vm30, %v426
    %429 = vxpose.xlu0.b32.start [1/16] %v397, 128
    %430 = vxpose.xlu0.b32.cont [2/16] %v398, 128
    %431 = vxpose.xlu0.b32.cont [3/16] 0.0, 128
    %432 = vxpose.xlu0.b32.cont [4/16] 0.0, 128
    %433 = vxpose.xlu0.b32.cont [5/16] 0.0, 128
    %434 = vxpose.xlu0.b32.cont [6/16] 0.0, 128
    %435 = vxpose.xlu0.b32.cont [7/16] 0.0, 128
    %436 = vxpose.xlu0.b32.cont [8/16] 0.0, 128
    %437 = vxpose.xlu0.b32.cont [9/16] 0.0, 128
    %438 = vxpose.xlu0.b32.cont [10/16] 0.0, 128
    %439 = vxpose.xlu0.b32.cont [11/16] 0.0, 128
    %440 = vxpose.xlu0.b32.cont [12/16] 0.0, 128
    %441 = vxpose.xlu0.b32.cont [13/16] 0.0, 128
    %442 = vxpose.xlu0.b32.cont [14/16] 0.0, 128
    %443 = vxpose.xlu0.b32.cont [15/16] 0.0, 128
    %444 = vxpose.xlu0.b32.end [16/16] 0.0, 128
    %v445 = vpop.trf.xlu0
    %v446 = vpop.trf.xlu0
    %v447 = vpop.trf.xlu0
    %v448 = vpop.trf.xlu0
    %v449 = vpop.trf.xlu0
    %v450 = vpop.trf.xlu0
    %v451 = vpop.trf.xlu0
    %v452 = vpop.trf.xlu0
    %v453 = vpop.trf.xlu0
    %v454 = vpop.trf.xlu0
    %v455 = vpop.trf.xlu0
    %v456 = vpop.trf.xlu0
    %v457 = vpop.trf.xlu0
    %v458 = vpop.trf.xlu0
    %v459 = vpop.trf.xlu0
    %v460 = vpop.trf.xlu0
    %vm461 = vcmask 123904
    %462 = vst.msk [vmem:[#allocation5] sm:$0x3] %vm461, %v445
    // Predicated region
    $region22: #{tpu_custom_call.1} parent=1 // pred_check
      _
    $region23: #{tpu_custom_call.1} parent=1 // pred_check_branch
      %464 = sbr.rel (0) target = $region25
    $region24: #{tpu_custom_call.1} parent=1 // pred_region
      %s466 = ssub.s32 256, 256
      %467 = vsyncadd [#allocation4], %s466
      %s468 = sshll.u32 [#allocation3], 4
      %s469 = int_to_ptr.vmem [resolvable:$true] %s468
      %474 = dma.vmem_to_hbm [thread:$0]  %s469, 256, %s5, [#allocation4], 128, 128, 8
    $region25: #{tpu_custom_call.1} parent=1 // pred_fallthru
      _
    // Predicated region
    $region26: #{tpu_custom_call.1} parent=1 // pred_check
      _
    $region27: #{tpu_custom_call.1} parent=1 // pred_check_branch
      %476 = sbr.rel (0) target = $region29
    $region28: #{tpu_custom_call.1} parent=1 // pred_region
      %s478 = ssub.s32 32, 32
      %479 = vsyncadd [#allocation6], %s478
      %s481 = sshll.u32 [#allocation5], 4
      %s482 = int_to_ptr.vmem [resolvable:$true] %s481
      %484 = dma.vmem_to_hbm [thread:$0]  %s482, 32, %s6, [#allocation6]
    $region29: #{tpu_custom_call.1} parent=1 // pred_fallthru
      _
    // Predicated region
    $region30: #{tpu_custom_call.1} parent=1 // pred_check
      _
    $region31: #{tpu_custom_call.1} parent=1 // pred_check_branch
      %486 = sbr.rel (0) target = $region33
    $region32: #{tpu_custom_call.1} parent=1 // pred_region
      %487 = dma.done [#allocation4], 256
    $region33: #{tpu_custom_call.1} parent=1 // pred_fallthru
      _
    // Predicated region
    $region34: #{tpu_custom_call.1} parent=1 // pred_check
      _
    $region35: #{tpu_custom_call.1} parent=1 // pred_check_branch
      %489 = sbr.rel (0) target = $region37
    $region36: #{tpu_custom_call.1} parent=1 // pred_region
      %490 = dma.done [#allocation6], 32
    $region37: #{tpu_custom_call.1} parent=1 // pred_fallthru
      _
    %491 = vsyncpa [#allocation4], 1
    %492 = vsyncpa [#allocation6], 1

</llo_original>
